<compile_context>
chip_gen: v7x
topology: tpu7x:2x2x1
jax: 0.10.0
libtpu: 0.0.40
codegen_flags: <defaults>
</compile_context>

<pallas_src>
import numpy as np
import jax
import jax.numpy as jnp
from jax import lax
from jax.experimental import pallas as pl
from jax.experimental.pallas import tpu as pltpu

MAX_TF = 1024            # max frames per grid step
USE_BF16_MATMUL = True   # bf16 operands + f32 accumulation on the MXU


# ---------------------------------------------------------------------------
# Parameter construction (host-side, deterministic, mirrors makeHandMapper)
# ---------------------------------------------------------------------------
def make_hand_mapper_np():
    base = np.zeros((20, 72, 72), dtype=np.float32)
    base[0, :15, :15] = np.eye(15, dtype=np.float32)
    eye3 = np.eye(3, dtype=np.float32)
    for fi in range(5):
        fi_idx = 4 - fi
        if fi == 0:
            row_start, row_end = 15 + 12 * fi_idx, 72
            col_start = 15 + 12 * fi_idx
            base[0, 15 + 12 * fi_idx:, :3] = np.concatenate([eye3] * 3, axis=0)
            base[fi + 1, row_start:row_end, col_start:col_start + 3] = \
                np.concatenate([eye3] * 3, axis=0)
            base[3 * (fi_idx + 2), row_start + 3:row_end, col_start + 3:col_start + 6] = \
                np.concatenate([eye3] * 2, axis=0)
            base[3 * (fi_idx + 2) + 1, row_start + 6:row_end, col_start + 6:col_start + 9] = eye3
        else:
            row_start, row_end = 15 + 12 * fi_idx, 15 + 12 * (fi_idx + 1)
            col_start = 15 + 12 * fi_idx
            base[0, row_start:row_end, 3 * fi:3 * (fi + 1)] = \
                np.concatenate([eye3] * 4, axis=0)
            base[fi + 1, row_start:row_end, col_start:col_start + 3] = \
                np.concatenate([eye3] * 4, axis=0)
            base[3 * (fi_idx + 2), row_start + 3:row_end, col_start + 3:col_start + 6] = \
                np.concatenate([eye3] * 3, axis=0)
            base[3 * (fi_idx + 2) + 1, row_start + 6:row_end, col_start + 6:col_start + 9] = \
                np.concatenate([eye3] * 2, axis=0)
            base[3 * (fi_idx + 2) + 2, row_start + 9:row_end, col_start + 9:col_start + 12] = eye3
    return np.stack([base, base], axis=0)  # (2, 20, 72, 72)


def build_mapper_param(bone_length_np):
    """mapper = einsum('SJMK,SK->SJM').reshape(2,20,24,3)  (the nn.Parameter)."""
    hand_mapper = make_hand_mapper_np()                                # (2,20,72,72)
    mapped = np.einsum("SJMK,SK->SJM", hand_mapper, bone_length_np)    # (2,20,72)
    return mapped.reshape(2, 20, 24, 3).astype(np.float32)


def build_fused_weight(mapper_param):
    """Fused block-diagonal contraction weight with PyTorch-output column order.

    W[m*120 + k*40 + (20*s + r), s*75 + (j+1)*3 + m] = mapper[s, r, j, k]
    so  out[f, s*75 + (j+1)*3 + m] = acq_joints[f, s, j, m] and the 6 wrist
    columns (s*75 + {0,1,2}) stay zero -> kernel output reshapes directly to
    (F, 2, 25, 3) with zero wrist already in place.
    """
    W = np.zeros((360, 150), dtype=np.float32)
    for m in range(3):
        for k in range(3):
            for s in range(2):
                r0 = m * 120 + k * 40 + 20 * s
                c0 = s * 75 + 3 + m
                W[r0:r0 + 20, c0:c0 + 72:3] = mapper_param[s, :, :, k]
    return W


# ---------------------------------------------------------------------------
# Pallas kernel: 6d-rotation -> matrix rows (VPU/EUP) + fused contraction (MXU)
# ---------------------------------------------------------------------------
def handmaker_kernel(ori_ref, w_ref, out_ref, lhs_ref):
    # ori_ref: (TF, 240) lanes = [a1x(40)|a1y(40)|a1z(40)|a2x(40)|a2y(40)|a2z(40)]
    # w_ref:   (360, 150) fused block-diagonal weight (grid-resident)
    # out_ref: (TF, 150) lanes = s*75 + (j+1)*3 + m  (wrist columns = 0)
    # lhs_ref: (TF, 360) f32 VMEM scratch, lanes = m*120 + k*40 + global_joint
    ori = ori_ref[...]
    # 40-lane component slices (frame-major layout kept so the output stays
    # frame-major; the non-128-aligned slices are a known, accepted cost).
    a1x = ori[:, 0:40]
    a1y = ori[:, 40:80]
    a1z = ori[:, 80:120]
    a2x = ori[:, 120:160]
    a2y = ori[:, 160:200]
    a2z = ori[:, 200:240]

    eps2 = jnp.float32(1e-24)  # == (1e-12)^2, matches F.normalize's max(||v||, eps)

    # b1 = normalize(a1)   (rsqrt on the EUP slot)
    inv1 = lax.rsqrt(jnp.maximum(a1x * a1x + a1y * a1y + a1z * a1z, eps2))
    b1x, b1y, b1z = a1x * inv1, a1y * inv1, a1z * inv1

    # b2 = normalize(a2 - (b1 . a2) b1)
    d = b1x * a2x + b1y * a2y + b1z * a2z
    ux, uy, uz = a2x - d * b1x, a2y - d * b1y, a2z - d * b1z
    inv2 = lax.rsqrt(jnp.maximum(ux * ux + uy * uy + uz * uz, eps2))
    b2x, b2y, b2z = ux * inv2, uy * inv2, uz * inv2

    # b3 = b1 x b2
    b3x = b1y * b2z - b1z * b2y
    b3y = b1z * b2x - b1x * b2z
    b3z = b1x * b2y - b1y * b2x

    # Assemble the (TF, 360) LHS in VMEM scratch (no 9-way lane concat).
    comps = (b1x, b1y, b1z, b2x, b2y, b2z, b3x, b3y, b3z)
    for idx, comp in enumerate(comps):
        lhs_ref[:, idx * 40:(idx + 1) * 40] = comp

    lhs = lhs_ref[...]
    if w_ref.dtype == jnp.bfloat16:
        # Single-pass bf16 MXU matmul, f32 accumulation (rotation rows in [-1,1]).
        out_ref[...] = jnp.dot(lhs.astype(jnp.bfloat16), w_ref[...],
                               preferred_element_type=jnp.float32)
    else:
        # Exact-f32 path; precision pinned so the MXU pass count is deterministic.
        out_ref[...] = jnp.dot(lhs, w_ref[...],
                               precision=lax.Precision.HIGHEST,
                               preferred_element_type=jnp.float32)


def _round_up(x, m):
    return ((x + m - 1) // m) * m


def _choose_tile(num_frame):
    tf = min(MAX_TF, _round_up(num_frame, 8))
    # Keep >= 2 grid steps when there is enough work so the "parallel" frame
    # axis can shard across both TensorCores on v7x (costs one extra ~0.35us
    # step on single-TC chips).
    if num_frame >= 16 and pl.cdiv(num_frame, tf) < 2:
        tf = _round_up(pl.cdiv(num_frame, 2), 8)
    return tf


def hand_maker_forward(orientation, w_big):
    """orientation: (F, 40, 6) f32, w_big: (360, 150) -> (F, 2, 25, 3) f32."""
    num_frame = orientation.shape[0]

    # Lane-dense, component-major input slab: (F, 240), lane = comp*40 + joint.
    # This is the only pre-kernel HBM copy (no padding, no post-kernel copies).
    ori_packed = jnp.transpose(orientation, (0, 2, 1)).reshape(num_frame, 240)

    tf = _choose_tile(num_frame)
    out = pl.pallas_call(
        handmaker_kernel,
        out_shape=jax.ShapeDtypeStruct((num_frame, 150), jnp.float32),
        grid=(pl.cdiv(num_frame, tf),),
        in_specs=[
            pl.BlockSpec((tf, 240), lambda i: (i, 0)),
            pl.BlockSpec((360, 150), lambda i: (0, 0)),   # resident weight
        ],
        out_specs=pl.BlockSpec((tf, 150), lambda i: (i, 0)),
        scratch_shapes=[pltpu.VMEM((tf, 360), jnp.float32)],
        compiler_params=pltpu.CompilerParams(
            dimension_semantics=("parallel",),
            vmem_limit_bytes=32 * 1024 * 1024),
    )(ori_packed, w_big)

    # Pure metadata: (F, 150) -> (F, 2, 25, 3); wrist rows already zero.
    return out.reshape(num_frame, 2, 25, 3)


# ---------------------------------------------------------------------------
# Pure-JAX f32 reference (mirrors the PyTorch forward)
# ---------------------------------------------------------------------------
def reference_forward(orientation, mapper_param):
    eps = 1e-12

    def normalize(v):
        n = jnp.sqrt(jnp.sum(v * v, axis=-1, keepdims=True))
        return v / jnp.maximum(n, eps)

    a1, a2 = orientation[..., :3], orientation[..., 3:]
    b1 = normalize(a1)
    b2 = normalize(a2 - jnp.sum(b1 * a2, axis=-1, keepdims=True) * b1)
    b3 = jnp.cross(b1, b2)
    mat = jnp.stack([b1, b2, b3], axis=-2)                  # (F, 40, 3, 3)
    num_frame = orientation.shape[0]
    mat = mat.reshape(num_frame, 2, 20, 3, 3)
    rel = jnp.einsum("FSRMK,SRJK->FSRJM", mat, mapper_param,
                     precision=lax.Precision.HIGHEST)
    acq = jnp.sum(rel, axis=2)                              # (F, 2, 24, 3)
    wrist = jnp.zeros((num_frame, 2, 1, 3), jnp.float32)
    return jnp.concatenate([wrist, acq], axis=2)


if __name__ == "__main__":
    key = jax.random.PRNGKey(0)
    k_bone, k_ori = jax.random.split(key)

    # bone_length : (2, 72)  -> mapper (2, 20, 24, 3) -> fused W (360, 150)
    bone_length = jax.random.normal(k_bone, (2, 72), dtype=jnp.float32)
    mapper_param = build_mapper_param(np.asarray(bone_length))
    w_dtype = jnp.bfloat16 if USE_BF16_MATMUL else jnp.float32
    w_big = jnp.asarray(build_fused_weight(mapper_param), dtype=w_dtype)
    mapper_j = jnp.asarray(mapper_param)

    # F = 8 (exact tile), 13 (ragged tail block), 40 (multi-step grid + ragged).
    for num_frame in (8, 13, 40):
        orientation = jax.random.normal(jax.random.fold_in(k_ori, num_frame),
                                        (num_frame, 40, 6), dtype=jnp.float32)
        out = jax.block_until_ready(hand_maker_forward(orientation, w_big))
        assert out.shape == (num_frame, 2, 25, 3), out.shape

        ref = reference_forward(orientation, mapper_j)
        err = float(jnp.max(jnp.abs(out - ref)))
        scale = max(1.0, float(jnp.max(jnp.abs(ref))))
        # bf16 single-pass MXU rounding bound for O(1) params; 1e-3 in f32 mode.
        tol = 2.5e-2 * scale if USE_BF16_MATMUL else 1e-3
        assert err < tol, f"F={num_frame}: max abs error {err} (tol {tol})"

    print("KERNEL_OK")
</pallas_src>

<mosaic_0001>
module attributes {stable_mosaic.version = 11 : i64} {
  func.func @handmaker_kernel(%arg0: i32, %arg1: memref<8x240xf32, #tpu.memory_space<vmem>>, %arg2: memref<360x150xbf16, #tpu.memory_space<vmem>>, %arg3: memref<8x150xf32, #tpu.memory_space<vmem>>, %arg4: memref<8x360xf32, #tpu.memory_space<vmem>>) attributes {dimension_semantics = [#tpu.dimension_semantics<parallel>], iteration_bounds = array<i64: 1>, scalar_prefetch = 0 : i64, scratch_operands = 1 : i64, tpu.core_type = #tpu.core_type<tc>, window_params = [{transform_indices = @transform_0, window_bounds = array<i64: 8, 240>}, {pipeline_mode = #tpu.pipeline_mode<synchronous>, transform_indices = @transform_1, window_bounds = array<i64: 360, 150>}, {transform_indices = @transform_2, window_bounds = array<i64: 8, 150>}]} {
    %c0 = arith.constant 0 : index
    %c0_0 = arith.constant 0 : index
    %0 = vector.load %arg1[%c0, %c0_0] : memref<8x240xf32, #tpu.memory_space<vmem>>, vector<8x240xf32>
    %1 = vector.extract_strided_slice %0 {offsets = [0, 0], sizes = [8, 40], strides = [1, 1]} : vector<8x240xf32> to vector<8x40xf32>
    %2 = vector.extract_strided_slice %0 {offsets = [0, 40], sizes = [8, 40], strides = [1, 1]} : vector<8x240xf32> to vector<8x40xf32>
    %3 = vector.extract_strided_slice %0 {offsets = [0, 80], sizes = [8, 40], strides = [1, 1]} : vector<8x240xf32> to vector<8x40xf32>
    %4 = vector.extract_strided_slice %0 {offsets = [0, 120], sizes = [8, 40], strides = [1, 1]} : vector<8x240xf32> to vector<8x40xf32>
    %5 = vector.extract_strided_slice %0 {offsets = [0, 160], sizes = [8, 40], strides = [1, 1]} : vector<8x240xf32> to vector<8x40xf32>
    %6 = vector.extract_strided_slice %0 {offsets = [0, 200], sizes = [8, 40], strides = [1, 1]} : vector<8x240xf32> to vector<8x40xf32>
    %7 = arith.mulf %1, %1 : vector<8x40xf32>
    %8 = arith.mulf %2, %2 : vector<8x40xf32>
    %9 = arith.addf %7, %8 : vector<8x40xf32>
    %10 = arith.mulf %3, %3 : vector<8x40xf32>
    %11 = arith.addf %9, %10 : vector<8x40xf32>
    %cst = arith.constant 1.000000e-24 : f32
    %12 = vector.broadcast %cst : f32 to vector<8x40xf32>
    %13 = arith.maximumf %11, %12 : vector<8x40xf32>
    %14 = math.rsqrt %13 : vector<8x40xf32>
    %15 = arith.mulf %1, %14 : vector<8x40xf32>
    %16 = arith.mulf %2, %14 : vector<8x40xf32>
    %17 = arith.mulf %3, %14 : vector<8x40xf32>
    %18 = arith.mulf %15, %4 : vector<8x40xf32>
    %19 = arith.mulf %16, %5 : vector<8x40xf32>
    %20 = arith.addf %18, %19 : vector<8x40xf32>
    %21 = arith.mulf %17, %6 : vector<8x40xf32>
    %22 = arith.addf %20, %21 : vector<8x40xf32>
    %23 = arith.mulf %22, %15 : vector<8x40xf32>
    %24 = arith.subf %4, %23 : vector<8x40xf32>
    %25 = arith.mulf %22, %16 : vector<8x40xf32>
    %26 = arith.subf %5, %25 : vector<8x40xf32>
    %27 = arith.mulf %22, %17 : vector<8x40xf32>
    %28 = arith.subf %6, %27 : vector<8x40xf32>
    %29 = arith.mulf %24, %24 : vector<8x40xf32>
    %30 = arith.mulf %26, %26 : vector<8x40xf32>
    %31 = arith.addf %29, %30 : vector<8x40xf32>
    %32 = arith.mulf %28, %28 : vector<8x40xf32>
    %33 = arith.addf %31, %32 : vector<8x40xf32>
    %cst_1 = arith.constant 1.000000e-24 : f32
    %34 = vector.broadcast %cst_1 : f32 to vector<8x40xf32>
    %35 = arith.maximumf %33, %34 : vector<8x40xf32>
    %36 = math.rsqrt %35 : vector<8x40xf32>
    %37 = arith.mulf %24, %36 : vector<8x40xf32>
    %38 = arith.mulf %26, %36 : vector<8x40xf32>
    %39 = arith.mulf %28, %36 : vector<8x40xf32>
    %40 = arith.mulf %16, %39 : vector<8x40xf32>
    %41 = arith.mulf %17, %38 : vector<8x40xf32>
    %42 = arith.subf %40, %41 : vector<8x40xf32>
    %43 = arith.mulf %17, %37 : vector<8x40xf32>
    %44 = arith.mulf %15, %39 : vector<8x40xf32>
    %45 = arith.subf %43, %44 : vector<8x40xf32>
    %46 = arith.mulf %15, %38 : vector<8x40xf32>
    %47 = arith.mulf %16, %37 : vector<8x40xf32>
    %48 = arith.subf %46, %47 : vector<8x40xf32>
    %c0_2 = arith.constant 0 : index
    %c0_3 = arith.constant 0 : index
    %49 = vector.load %arg4[%c0_2, %c0_3] : memref<8x360xf32, #tpu.memory_space<vmem>>, vector<8x40xf32>
    tpu.vector_store %arg4[%c0_2, %c0_3], %15 {strides = array<i32>} : memref<8x360xf32, #tpu.memory_space<vmem>>, vector<8x40xf32>,
    %c0_4 = arith.constant 0 : index
    %c40 = arith.constant 40 : index
    %50 = vector.load %arg4[%c0_4, %c40] : memref<8x360xf32, #tpu.memory_space<vmem>>, vector<8x40xf32>
    tpu.vector_store %arg4[%c0_4, %c40], %16 {strides = array<i32>} : memref<8x360xf32, #tpu.memory_space<vmem>>, vector<8x40xf32>,
    %c0_5 = arith.constant 0 : index
    %c80 = arith.constant 80 : index
    %51 = vector.load %arg4[%c0_5, %c80] : memref<8x360xf32, #tpu.memory_space<vmem>>, vector<8x40xf32>
    tpu.vector_store %arg4[%c0_5, %c80], %17 {strides = array<i32>} : memref<8x360xf32, #tpu.memory_space<vmem>>, vector<8x40xf32>,
    %c0_6 = arith.constant 0 : index
    %c120 = arith.constant 120 : index
    %52 = vector.load %arg4[%c0_6, %c120] : memref<8x360xf32, #tpu.memory_space<vmem>>, vector<8x40xf32>
    tpu.vector_store %arg4[%c0_6, %c120], %37 {strides = array<i32>} : memref<8x360xf32, #tpu.memory_space<vmem>>, vector<8x40xf32>,
    %c0_7 = arith.constant 0 : index
    %c160 = arith.constant 160 : index
    %53 = vector.load %arg4[%c0_7, %c160] : memref<8x360xf32, #tpu.memory_space<vmem>>, vector<8x40xf32>
    tpu.vector_store %arg4[%c0_7, %c160], %38 {strides = array<i32>} : memref<8x360xf32, #tpu.memory_space<vmem>>, vector<8x40xf32>,
    %c0_8 = arith.constant 0 : index
    %c200 = arith.constant 200 : index
    %54 = vector.load %arg4[%c0_8, %c200] : memref<8x360xf32, #tpu.memory_space<vmem>>, vector<8x40xf32>
    tpu.vector_store %arg4[%c0_8, %c200], %39 {strides = array<i32>} : memref<8x360xf32, #tpu.memory_space<vmem>>, vector<8x40xf32>,
    %c0_9 = arith.constant 0 : index
    %c240 = arith.constant 240 : index
    %55 = vector.load %arg4[%c0_9, %c240] : memref<8x360xf32, #tpu.memory_space<vmem>>, vector<8x40xf32>
    tpu.vector_store %arg4[%c0_9, %c240], %42 {strides = array<i32>} : memref<8x360xf32, #tpu.memory_space<vmem>>, vector<8x40xf32>,
    %c0_10 = arith.constant 0 : index
    %c280 = arith.constant 280 : index
    %56 = vector.load %arg4[%c0_10, %c280] : memref<8x360xf32, #tpu.memory_space<vmem>>, vector<8x40xf32>
    tpu.vector_store %arg4[%c0_10, %c280], %45 {strides = array<i32>} : memref<8x360xf32, #tpu.memory_space<vmem>>, vector<8x40xf32>,
    %c0_11 = arith.constant 0 : index
    %c320 = arith.constant 320 : index
    %57 = vector.load %arg4[%c0_11, %c320] : memref<8x360xf32, #tpu.memory_space<vmem>>, vector<8x40xf32>
    tpu.vector_store %arg4[%c0_11, %c320], %48 {strides = array<i32>} : memref<8x360xf32, #tpu.memory_space<vmem>>, vector<8x40xf32>,
    %c0_12 = arith.constant 0 : index
    %c0_13 = arith.constant 0 : index
    %58 = vector.load %arg4[%c0_12, %c0_13] : memref<8x360xf32, #tpu.memory_space<vmem>>, vector<8x360xf32>
    %59 = arith.truncf %58 : vector<8x360xf32> to vector<8x360xbf16>
    %c0_14 = arith.constant 0 : index
    %c0_15 = arith.constant 0 : index
    %60 = vector.load %arg2[%c0_14, %c0_15] : memref<360x150xbf16, #tpu.memory_space<vmem>>, vector<360x150xbf16>
    %cst_16 = arith.constant dense<0.000000e+00> : vector<8x150xf32>
    %61 = tpu.matmul %59, %60, %cst_16 {dimension_numbers = #tpu.dot_dimension_numbers<[1], [0], [0], [1], [0, 0, 1, 1], [], []>} : vector<8x360xbf16>, vector<360x150xbf16>, vector<8x150xf32> -> vector<8x150xf32>
    %c0_17 = arith.constant 0 : index
    %c0_18 = arith.constant 0 : index
    %62 = vector.load %arg3[%c0_17, %c0_18] : memref<8x150xf32, #tpu.memory_space<vmem>>, vector<8x150xf32>
    tpu.vector_store %arg3[%c0_17, %c0_18], %61 {strides = array<i32>} : memref<8x150xf32, #tpu.memory_space<vmem>>, vector<8x150xf32>,
    return
  }
  func.func @transform_0(%arg0: i32) -> (i32, i32) {
    %c0_i32 = arith.constant 0 : i32
    %c0_i32_0 = arith.constant 0 : i32
    return %arg0, %c0_i32 : i32, i32
  }
  func.func @transform_1(%arg0: i32) -> (i32, i32) {
    %c0_i32 = arith.constant 0 : i32
    %c0_i32_0 = arith.constant 0 : i32
    %c0_i32_1 = arith.constant 0 : i32
    return %c0_i32, %c0_i32_0 : i32, i32
  }
  func.func @transform_2(%arg0: i32) -> (i32, i32) {
    %c0_i32 = arith.constant 0 : i32
    %c0_i32_0 = arith.constant 0 : i32
    return %arg0, %c0_i32 : i32, i32
  }
}

</mosaic_0001>

<llo_original>
// kernel: tpu_custom_call.1
$region0: #{tpu_custom_call.1}
  #allocation0 [shape = 'u32[]', space=smem, size = 0x4, offset = 0x4, fixed_abs, tag = 'smem constant byte address 0x4 - core index']
  #allocation1 [shape = 'u32[144,128]{1,0:T(1,128)}', space=vmem, size = 0x12000, scoped, tag = 'internal scratch']
  #allocation2 [shape = 'f32[8,360]{1,0:T(8,128)}', space=vmem, size = 0x3000, scoped, tag = 'scratch operand']
  %s0 = inlined_call_operand.vmem [shape: f32[8,240], index: 0, kind: input, shape index: {}]
  %s1 = inlined_call_operand.vmem [shape: bf16[360,150], index: 1, kind: input, shape index: {}]
  %s2 = inlined_call_operand.hbm [shape: f32[8,150], index: 2, kind: output, shape index: {}]
  %s3 = sld [smem:[#allocation0]]
  $region18: #{tpu_custom_call.1} parent=0
    _
  %s5 = ssub.s32 1, %s3
  %s6 = scalar_select 0, %s5, %s3
  $region1: #{tpu_custom_call.1} parent=0
    #allocation3 [shape = 'u8[8192]{0}', space=vmem, size = 0x2000, scoped, tag = 'output window, operand 0, single buffered']
    #allocation4 [shape = 's32[1]{0}', space=sflag, size = 0x4, scoped, tag = 'scoped memory for tpu_custom_call.1']
    %7 = vsyncpa [#allocation4], 0
    // Predicated region
    $region2: #{tpu_custom_call.1} parent=1 // pred_check
      _
    $region3: #{tpu_custom_call.1} parent=1 // pred_check_branch
      %9 = sbr.rel (0) target = $region5
    $region4: #{tpu_custom_call.1} parent=1 // pred_region
      _
    $region5: #{tpu_custom_call.1} parent=1 // pred_fallthru
      _
    // Predicated region
    $region6: #{tpu_custom_call.1} parent=1 // pred_check
      _
    $region7: #{tpu_custom_call.1} parent=1 // pred_check_branch
      %11 = sbr.rel (0) target = $region9
    $region8: #{tpu_custom_call.1} parent=1 // pred_region
      _
    $region9: #{tpu_custom_call.1} parent=1 // pred_fallthru
      _
    %v13 = vld [vmem:[%s0] sm:$0xff]
    %v14 = vld [vmem:[%s0 + $0x8] sm:$0xff]
    %v15 = vmul.f32 %v13, %v13
    %17 = vrot.lane.b32.xlu0 %v15, 88
    %v18 = vpop.permute.xlu0 %17
    %v20 = vadd.f32 %v15, %v18
    %21 = vrot.lane.b32.xlu0 %v15, 48
    %v22 = vpop.permute.xlu0 %21
    %v24 = vadd.f32 %v20, %v22
    %v25 = vmax.f32 %v24, 1e-24
    %v26 = vrsqrt.pop %v25
    %v27 = vmul.f32 %v13, %v26
    %29 = vrot.lane.b32.xlu0 %v26, 40
    %v30 = vpop.permute.xlu0 %29
    %v32 = vmul.f32 %v13, %v30
    %33 = vrot.lane.b32.xlu0 %v26, 80
    %v34 = vpop.permute.xlu0 %33
    %v36 = vmul.f32 %v13, %v34
    %39 = vrot.lane.b32.xlu0 %v13, 8
    %v40 = vpop.permute.xlu0 %39
    %41 = vrot.lane.b32.xlu0 %v14, 8
    %v42 = vpop.permute.xlu0 %41
    %vm43 = vcmask 64512
    %v44 = vsel %vm43, %v40, %v42
    %v46 = vmul.f32 %v27, %v44
    %v48 = vmul.f32 %v32, %v42
    %50 = vrot.lane.b32.xlu0 %v48, 88
    %v51 = vpop.permute.xlu0 %50
    %v53 = vadd.f32 %v46, %v51
    %v54 = vmul.f32 %v36, %v42
    %56 = vrot.lane.b32.xlu0 %v54, 48
    %v57 = vpop.permute.xlu0 %56
    %v59 = vadd.f32 %v53, %v57
    %v60 = vmul.f32 %v59, %v27
    %62 = vrot.lane.b32.xlu0 %v60, 120
    %v63 = vpop.permute.xlu0 %62
    %v65 = vsub.f32 %v13, %v63
    %v66 = vsub.f32 %v14, %v63
    %68 = vrot.lane.b32.xlu0 %v32, 88
    %v69 = vpop.permute.xlu0 %68
    %v71 = vmul.f32 %v59, %v69
    %73 = vrot.lane.b32.xlu0 %v71, 32
    %v74 = vpop.permute.xlu0 %73
    %v76 = vsub.f32 %v14, %v74
    %78 = vrot.lane.b32.xlu0 %v36, 48
    %v79 = vpop.permute.xlu0 %78
    %v81 = vmul.f32 %v59, %v79
    %83 = vrot.lane.b32.xlu0 %v81, 72
    %v84 = vpop.permute.xlu0 %83
    %v86 = vsub.f32 %v14, %v84
    %v87 = vmul.f32 %v65, %v65
    %v88 = vmul.f32 %v66, %v66
    %v89 = vmul.f32 %v76, %v76
    %91 = vrot.lane.b32.xlu0 %v89, 88
    %v92 = vpop.permute.xlu0 %91
    %v94 = vadd.f32 %v87, %v92
    %v95 = vadd.f32 %v88, %v92
    %v96 = vmul.f32 %v86, %v86
    %98 = vrot.lane.b32.xlu0 %v96, 48
    %v99 = vpop.permute.xlu0 %98
    %v101 = vadd.f32 %v94, %v99
    %v102 = vadd.f32 %v95, %v99
    %v103 = vmax.f32 %v101, 1e-24
    %v104 = vmax.f32 %v102, 1e-24
    %v105 = vrsqrt.pop %v103
    %v106 = vrsqrt.pop %v104
    %v107 = vmul.f32 %v65, %v105
    %v108 = vmul.f32 %v66, %v106
    %111 = vrot.lane.b32.xlu0 %v105, 40
    %v112 = vpop.permute.xlu0 %111
    %113 = vrot.lane.b32.xlu0 %v106, 40
    %v114 = vpop.permute.xlu0 %113
    %vm115 = vcmask 326656
    %v116 = vsel %vm115, %v112, %v114
    %v118 = vmul.f32 %v76, %v116
    %119 = vrot.lane.b32.xlu0 %v105, 80
    %v120 = vpop.permute.xlu0 %119
    %121 = vrot.lane.b32.xlu0 %v106, 80
    %v122 = vpop.permute.xlu0 %121
    %vm123 = vcmask 654336
    %v124 = vsel %vm123, %v120, %v122
    %v126 = vmul.f32 %v86, %v124
    %128 = vrot.lane.b32.xlu0 %v126, 96
    %v129 = vpop.permute.xlu0 %128
    %v131 = vmul.f32 %v32, %v129
    %133 = vrot.lane.b32.xlu0 %v118, 48
    %v134 = vpop.permute.xlu0 %133
    %v136 = vmul.f32 %v36, %v134
    %138 = vrot.lane.b32.xlu0 %v136, 88
    %v139 = vpop.permute.xlu0 %138
    %v141 = vsub.f32 %v131, %v139
    %144 = vrot.lane.b32.xlu0 %v107, 88
    %v145 = vpop.permute.xlu0 %144
    %146 = vrot.lane.b32.xlu0 %v108, 88
    %v147 = vpop.permute.xlu0 %146
    %vm148 = vcmask 719872
    %v149 = vsel %vm148, %v145, %v147
    %v151 = vmul.f32 %v36, %v149
    %152 = vrot.lane.b32.xlu0 %v126, 56
    %v153 = vpop.permute.xlu0 %152
    %v155 = vmul.f32 %v27, %v153
    %157 = vrot.lane.b32.xlu0 %v155, 80
    %v158 = vpop.permute.xlu0 %157
    %v160 = vsub.f32 %v151, %v158
    %161 = vrot.lane.b32.xlu0 %v118, 96
    %v162 = vpop.permute.xlu0 %161
    %v164 = vmul.f32 %v27, %v162
    %165 = vrot.lane.b32.xlu0 %v107, 48
    %v166 = vpop.permute.xlu0 %165
    %167 = vrot.lane.b32.xlu0 %v108, 48
    %v168 = vpop.permute.xlu0 %167
    %vm169 = vcmask 392192
    %v170 = vsel %vm169, %v166, %v168
    %v172 = vmul.f32 %v32, %v170
    %174 = vrot.lane.b32.xlu0 %v172, 88
    %v175 = vpop.permute.xlu0 %174
    %v177 = vsub.f32 %v164, %v175
    %178 = vst.msk [vmem:[#allocation2] sm:$0xff] %vm115, %v27
    %vm179 = vcmask 654656
    %180 = vst.msk [vmem:[#allocation2] sm:$0xff] %vm179, %v32
    %vm181 = vcmask 982656
    %182 = vst.msk [vmem:[#allocation2] sm:$0xff] %vm181, %v36
    %vm183 = vcmask 1048512
    %184 = vst.msk [vmem:[#allocation2] sm:$0xff] %vm183, %v107
    %vm185 = vcmask 261120
    %186 = vst.msk [vmem:[#allocation2 + $0x8] sm:$0xff] %vm185, %v108
    %vm187 = vcmask 589056
    %188 = vst.msk [vmem:[#allocation2 + $0x8] sm:$0xff] %vm187, %v118
    %vm189 = vcmask 917056
    %190 = vst.msk [vmem:[#allocation2 + $0x8] sm:$0xff] %vm189, %v126
    %192 = vrot.lane.b32.xlu0 %v141, 72
    %v193 = vpop.permute.xlu0 %192
    %vm195 = vcmask 1048448
    %196 = vst.msk [vmem:[#allocation2 + $0x8] sm:$0xff] %vm195, %v193
    %vm197 = vcmask 195584
    %198 = vst.msk [vmem:[#allocation2 + $0x10] sm:$0xff] %vm197, %v193
    %200 = vrot.lane.b32.xlu0 %v160, 72
    %v201 = vpop.permute.xlu0 %200
    %vm203 = vcmask 523456
    %204 = vst.msk [vmem:[#allocation2 + $0x10] sm:$0xff] %vm203, %v201
    %206 = vrot.lane.b32.xlu0 %v177, 64
    %v207 = vpop.permute.xlu0 %206
    %vm209 = vcmask 851456
    %210 = vst.msk [vmem:[#allocation2 + $0x10] sm:$0xff] %vm209, %v207
    %v211 = vld [vmem:[#allocation2] sm:$0xff]
    %v212 = vld [vmem:[#allocation2 + $0x8] sm:$0xff]
    %v213 = vld [vmem:[#allocation2 + $0x10] sm:$0xff]
    %v214 = vpack.c.bf16 %v211, %v211
    %v215 = vpack.c.bf16 %v212, %v212
    %v216 = vpack.c.bf16 %v213, %v213
    %v217 = vld [vmem:[%s1] sm:$0xff]
    %v218 = vld [vmem:[%s1 + $0x8] sm:$0xff]
    %v219 = vld [vmem:[%s1 + $0x10] sm:$0xff]
    %v220 = vld [vmem:[%s1 + $0x18] sm:$0xff]
    %v221 = vld [vmem:[%s1 + $0x20] sm:$0xff]
    %v222 = vld [vmem:[%s1 + $0x28] sm:$0xff]
    %v223 = vld [vmem:[%s1 + $0x30] sm:$0xff]
    %v224 = vld [vmem:[%s1 + $0x38] sm:$0xff]
    %v225 = vld [vmem:[%s1 + $0x40] sm:$0xff]
    %v226 = vld [vmem:[%s1 + $0x48] sm:$0xff]
    %v227 = vld [vmem:[%s1 + $0x50] sm:$0xff]
    %v228 = vld [vmem:[%s1 + $0x58] sm:$0xff]
    %v229 = vld [vmem:[%s1 + $0x60] sm:$0xff]
    %v230 = vld [vmem:[%s1 + $0x68] sm:$0xff]
    %v231 = vld [vmem:[%s1 + $0x70] sm:$0xff]
    %v232 = vld [vmem:[%s1 + $0x78] sm:$0xff]
    %v233 = vld [vmem:[%s1 + $0x80] sm:$0xff]
    %v234 = vld [vmem:[%s1 + $0x88] sm:$0xff]
    %v235 = vld [vmem:[%s1 + $0x90] sm:$0xff]
    %v236 = vld [vmem:[%s1 + $0x98] sm:$0xff]
    %v237 = vld [vmem:[%s1 + $0xa0] sm:$0xff]
    %v238 = vld [vmem:[%s1 + $0xa8] sm:$0xff]
    %v239 = vld [vmem:[%s1 + $0xb0] sm:$0xff]
    %v240 = vld [vmem:[%s1 + $0xb8] sm:$0xff]
    %v241 = vld [vmem:[%s1 + $0xc0] sm:$0xff]
    %v242 = vld [vmem:[%s1 + $0xc8] sm:$0xff]
    %v243 = vld [vmem:[%s1 + $0xd0] sm:$0xff]
    %v244 = vld [vmem:[%s1 + $0xd8] sm:$0xff]
    %v245 = vld [vmem:[%s1 + $0xe0] sm:$0xff]
    %v246 = vld [vmem:[%s1 + $0xe8] sm:$0xff]
    %v247 = vld [vmem:[%s1 + $0xf0] sm:$0xff]
    %v248 = vld [vmem:[%s1 + $0xf8] sm:$0xff]
    %v249 = vld [vmem:[%s1 + $0x100] sm:$0xff]
    %v250 = vld [vmem:[%s1 + $0x108] sm:$0xff]
    %v251 = vld [vmem:[%s1 + $0x110] sm:$0xff]
    %v252 = vld [vmem:[%s1 + $0x118] sm:$0xff]
    %v253 = vld [vmem:[%s1 + $0x120] sm:$0xff]
    %v254 = vld [vmem:[%s1 + $0x128] sm:$0xff]
    %v255 = vld [vmem:[%s1 + $0x130] sm:$0xff]
    %v256 = vld [vmem:[%s1 + $0x138] sm:$0xff]
    %v257 = vld [vmem:[%s1 + $0x140] sm:$0xff]
    %v258 = vld [vmem:[%s1 + $0x148] sm:$0xff]
    %v259 = vld [vmem:[%s1 + $0x150] sm:$0xff]
    %v260 = vld [vmem:[%s1 + $0x158] sm:$0xff]
    %v261 = vld [vmem:[%s1 + $0x160] sm:$0xff]
    %v307 = vunpack.c.l.b16 %v217
    %v308 = vunpack.c.h.b16 %v217
    %v309 = vunpack.c.l.b16 %v218
    %v310 = vunpack.c.h.b16 %v218
    %v311 = vunpack.c.l.b16 %v219
    %v312 = vunpack.c.h.b16 %v219
    %v313 = vunpack.c.l.b16 %v220
    %v314 = vunpack.c.h.b16 %v220
    %v315 = vunpack.c.l.b16 %v221
    %v316 = vunpack.c.h.b16 %v221
    %v317 = vunpack.c.l.b16 %v222
    %v318 = vunpack.c.h.b16 %v222
    %v319 = vunpack.c.l.b16 %v223
    %v320 = vunpack.c.h.b16 %v223
    %v321 = vunpack.c.l.b16 %v224
    %v322 = vunpack.c.h.b16 %v224
    %v323 = vunpack.c.l.b16 %v225
    %v324 = vunpack.c.h.b16 %v225
    %v325 = vunpack.c.l.b16 %v226
    %v326 = vunpack.c.h.b16 %v226
    %v327 = vunpack.c.l.b16 %v227
    %v328 = vunpack.c.h.b16 %v227
    %v329 = vunpack.c.l.b16 %v228
    %v330 = vunpack.c.h.b16 %v228
    %v331 = vunpack.c.l.b16 %v229
    %v332 = vunpack.c.h.b16 %v229
    %v333 = vunpack.c.l.b16 %v230
    %v334 = vunpack.c.h.b16 %v230
    %v335 = vunpack.c.l.b16 %v231
    %v336 = vunpack.c.h.b16 %v231
    %v337 = vunpack.c.l.b16 %v232
    %v338 = vunpack.c.h.b16 %v232
    %v339 = vunpack.c.l.b16 %v233
    %v340 = vunpack.c.h.b16 %v233
    %v341 = vunpack.c.l.b16 %v234
    %v342 = vunpack.c.h.b16 %v234
    %v343 = vunpack.c.l.b16 %v235
    %v344 = vunpack.c.h.b16 %v235
    %v345 = vunpack.c.l.b16 %v236
    %v346 = vunpack.c.h.b16 %v236
    %v347 = vunpack.c.l.b16 %v237
    %v348 = vunpack.c.h.b16 %v237
    %v349 = vunpack.c.l.b16 %v238
    %v350 = vunpack.c.h.b16 %v238
    %v351 = vunpack.c.l.b16 %v239
    %v352 = vunpack.c.h.b16 %v239
    %v353 = vunpack.c.l.b16 %v240
    %v354 = vunpack.c.h.b16 %v240
    %v355 = vunpack.c.l.b16 %v241
    %v356 = vunpack.c.h.b16 %v241
    %v357 = vunpack.c.l.b16 %v242
    %v358 = vunpack.c.h.b16 %v242
    %v359 = vunpack.c.l.b16 %v243
    %v360 = vunpack.c.h.b16 %v243
    %v361 = vunpack.c.l.b16 %v244
    %v362 = vunpack.c.h.b16 %v244
    %v363 = vunpack.c.l.b16 %v245
    %v364 = vunpack.c.h.b16 %v245
    %v365 = vunpack.c.l.b16 %v246
    %v366 = vunpack.c.h.b16 %v246
    %v367 = vunpack.c.l.b16 %v247
    %v368 = vunpack.c.h.b16 %v247
    %v369 = vunpack.c.l.b16 %v248
    %v370 = vunpack.c.h.b16 %v248
    %v371 = vunpack.c.l.b16 %v249
    %v372 = vunpack.c.h.b16 %v249
    %v373 = vunpack.c.l.b16 %v250
    %v374 = vunpack.c.h.b16 %v250
    %v375 = vunpack.c.l.b16 %v251
    %v376 = vunpack.c.h.b16 %v251
    %v377 = vunpack.c.l.b16 %v252
    %v378 = vunpack.c.h.b16 %v252
    %v379 = vunpack.c.l.b16 %v253
    %v380 = vunpack.c.h.b16 %v253
    %v381 = vunpack.c.l.b16 %v254
    %v382 = vunpack.c.h.b16 %v254
    %v383 = vunpack.c.l.b16 %v255
    %v384 = vunpack.c.h.b16 %v255
    %v385 = vunpack.c.l.b16 %v256
    %v386 = vunpack.c.h.b16 %v256
    %v387 = vunpack.c.l.b16 %v257
    %v388 = vunpack.c.h.b16 %v257
    %v389 = vunpack.c.l.b16 %v258
    %v390 = vunpack.c.h.b16 %v258
    %v391 = vunpack.c.l.b16 %v259
    %v392 = vunpack.c.h.b16 %v259
    %v393 = vunpack.c.l.b16 %v260
    %v394 = vunpack.c.h.b16 %v260
    %v395 = vunpack.c.l.b16 %v261
    %v396 = vunpack.c.h.b16 %v261
    %v397 = vpack.c.b16 %v309, %v307
    %v398 = vpack.c.b16 %v310, %v308
    %v399 = vpack.c.b16 %v313, %v311
    %v400 = vpack.c.b16 %v314, %v312
    %v401 = vpack.c.b16 %v317, %v315
    %v402 = vpack.c.b16 %v318, %v316
    %v403 = vpack.c.b16 %v321, %v319
    %v404 = vpack.c.b16 %v322, %v320
    %v405 = vpack.c.b16 %v325, %v323
    %v406 = vpack.c.b16 %v326, %v324
    %v407 = vpack.c.b16 %v329, %v327
    %v408 = vpack.c.b16 %v330, %v328
    %v409 = vpack.c.b16 %v333, %v331
    %v410 = vpack.c.b16 %v334, %v332
    %v411 = vpack.c.b16 %v337, %v335
    %v412 = vpack.c.b16 %v338, %v336
    %v413 = vpack.c.b16 %v341, %v339
    %v414 = vpack.c.b16 %v342, %v340
    %v415 = vpack.c.b16 %v345, %v343
    %v416 = vpack.c.b16 %v346, %v344
    %v417 = vpack.c.b16 %v349, %v347
    %v418 = vpack.c.b16 %v350, %v348
    %v419 = vpack.c.b16 %v353, %v351
    %v420 = vpack.c.b16 %v354, %v352
    %v421 = vpack.c.b16 %v357, %v355
    %v422 = vpack.c.b16 %v358, %v356
    %v423 = vpack.c.b16 %v361, %v359
    %v424 = vpack.c.b16 %v362, %v360
    %v425 = vpack.c.b16 %v365, %v363
    %v426 = vpack.c.b16 %v366, %v364
    %v427 = vpack.c.b16 %v369, %v367
    %v428 = vpack.c.b16 %v370, %v368
    %v429 = vpack.c.b16 %v373, %v371
    %v430 = vpack.c.b16 %v374, %v372
    %v431 = vpack.c.b16 %v377, %v375
    %v432 = vpack.c.b16 %v378, %v376
    %v433 = vpack.c.b16 %v381, %v379
    %v434 = vpack.c.b16 %v382, %v380
    %v435 = vpack.c.b16 %v385, %v383
    %v436 = vpack.c.b16 %v386, %v384
    %v437 = vpack.c.b16 %v389, %v387
    %v438 = vpack.c.b16 %v390, %v388
    %v439 = vpack.c.b16 %v393, %v391
    %v440 = vpack.c.b16 %v394, %v392
    %v441 = vpack.c.b16 %v395, %v395
    %v442 = vpack.c.b16 %v396, %v396
    %vm487 = vcmask 850944
    %v489 = vsel %vm487, %v216, 0
    %vm491 = vcmask 1043456
    %v493 = vsel %vm491, %v441, 0
    %v496 = vsel %vm491, %v442, 0
    %498 = vmatprep.subr.bf16.mxu0 %v398
    %499 = vmatpush1.bf16.msra.mxu0 %v397
    %500 = vmatprep.subr.bf16.mxu0 %v400
    %501 = vmatpush1.bf16.msra.mxu0 %v399
    %502 = vmatprep.subr.bf16.mxu0 %v402
    %503 = vmatpush1.bf16.msra.mxu0 %v401
    %504 = vmatprep.subr.bf16.mxu0 %v404
    %505 = vmatpush1.bf16.msra.mxu0 %v403
    %506 = vmatprep.subr.bf16.mxu0 %v406
    %507 = vmatpush1.bf16.msra.mxu0 %v405
    %508 = vmatprep.subr.bf16.mxu0 %v408
    %509 = vmatpush1.bf16.msra.mxu0 %v407
    %510 = vmatprep.subr.bf16.mxu0 %v410
    %511 = vmatpush1.bf16.msra.mxu0 %v409
    %512 = vmatprep.subr.bf16.mxu0 %v412
    %513 = vmatpush1.bf16.msra.mxu0 %v411
    %514 = vmatprep.subr.bf16.mxu0 %v414
    %515 = vmatpush1.bf16.msra.mxu0 %v413
    %516 = vmatprep.subr.bf16.mxu0 %v416
    %517 = vmatpush1.bf16.msra.mxu0 %v415
    %518 = vmatprep.subr.bf16.mxu0 %v418
    %519 = vmatpush1.bf16.msra.mxu0 %v417
    %520 = vmatprep.subr.bf16.mxu0 %v420
    %521 = vmatpush1.bf16.msra.mxu0 %v419
    %522 = vmatprep.subr.bf16.mxu0 %v422
    %523 = vmatpush1.bf16.msra.mxu0 %v421
    %524 = vmatprep.subr.bf16.mxu0 %v424
    %525 = vmatpush1.bf16.msra.mxu0 %v423
    %526 = vmatprep.subr.bf16.mxu0 %v426
    %527 = vmatpush1.bf16.msra.mxu0 %v425
    %528 = vmatprep.subr.bf16.mxu0 %v428
    %529 = vmatpush1.bf16.msra.mxu0 %v427
    %530 = vmatprep.mubr.bf16.mxu0 %v215
    %531 = vmatmul.mubr.bf16.gmra.mrb[0].mxu0 %v214
    %v532 = vpop.f32.mrb[0].mxu0
    %v533 = vadd.f32 0.0, %v532
    %v534 = vpop.f32.mrb[0].mxu0
    %v535 = vadd.f32 0.0, %v534
    %v536 = vpop.f32.mrb[0].mxu0
    %v537 = vpop.f32.mrb[0].mxu0
    %538 = vdwg.mxu0
    %539 = vmatprep.subr.bf16.mxu0 %v430
    %540 = vmatpush1.bf16.msra.mxu0 %v429
    %541 = vmatprep.subr.bf16.mxu0 %v432
    %542 = vmatpush1.bf16.msra.mxu0 %v431
    %543 = vmatprep.subr.bf16.mxu0 %v434
    %544 = vmatpush1.bf16.msra.mxu0 %v433
    %545 = vmatprep.subr.bf16.mxu0 %v436
    %546 = vmatpush1.bf16.msra.mxu0 %v435
    %547 = vmatprep.subr.bf16.mxu0 %v438
    %548 = vmatpush1.bf16.msra.mxu0 %v437
    %549 = vmatprep.subr.bf16.mxu0 %v440
    %550 = vmatpush1.bf16.msra.mxu0 %v439
    %551 = vmatprep.subr.bf16.mxu0 %v496
    %552 = vmatpush1.bf16.msra.mxu0 %v493
    %553 = vmatprep.subr.bf16.mxu0 0
    %554 = vmatpush1.bf16.msra.mxu0 0
    %555 = vmatprep.subr.bf16.mxu0 0
    %556 = vmatpush1.bf16.msra.mxu0 0
    %557 = vmatprep.subr.bf16.mxu0 0
    %558 = vmatpush1.bf16.msra.mxu0 0
    %559 = vmatprep.subr.bf16.mxu0 0
    %560 = vmatpush1.bf16.msra.mxu0 0
    %561 = vmatprep.subr.bf16.mxu0 0
    %562 = vmatpush1.bf16.msra.mxu0 0
    %563 = vmatprep.subr.bf16.mxu0 0
    %564 = vmatpush1.bf16.msra.mxu0 0
    %565 = vmatprep.subr.bf16.mxu0 0
    %566 = vmatpush1.bf16.msra.mxu0 0
    %567 = vmatprep.subr.bf16.mxu0 0
    %568 = vmatpush1.bf16.msra.mxu0 0
    %569 = vmatprep.subr.bf16.mxu0 0
    %570 = vmatpush1.bf16.msra.mxu0 0
    %571 = vmatprep.mubr.bf16.mxu0 0
    %572 = vmatmul.mubr.bf16.gmra.mrb[0].mxu0 %v489
    %v573 = vpop.f32.mrb[0].mxu0
    %v574 = vadd.f32 %v533, %v573
    %v575 = vpop.f32.mrb[0].mxu0
    %v576 = vadd.f32 %v535, %v575
    %v577 = vpop.f32.mrb[0].mxu0
    %v578 = vpop.f32.mrb[0].mxu0
    %579 = vdwg.mxu0
    %580 = vst [vmem:[#allocation3] sm:$0xff] %v574
    %vm581 = vcmask 179200
    %582 = vst.msk [vmem:[#allocation3 + $0x8] sm:$0xff] %vm581, %v576
    // Predicated region
    $region10: #{tpu_custom_call.1} parent=1 // pred_check
      _
    $region11: #{tpu_custom_call.1} parent=1 // pred_check_branch
      %584 = sbr.rel (0) target = $region13
    $region12: #{tpu_custom_call.1} parent=1 // pred_region
      %s586 = ssub.s32 256, 256
      %587 = vsyncadd [#allocation4], %s586
      %s589 = sshll.u32 [#allocation3], 4
      %s590 = int_to_ptr.vmem [resolvable:$true] %s589
      %592 = dma.vmem_to_hbm [thread:$0]  %s590, 256, %s2, [#allocation4]
    $region13: #{tpu_custom_call.1} parent=1 // pred_fallthru
      _
    // Predicated region
    $region14: #{tpu_custom_call.1} parent=1 // pred_check
      _
    $region15: #{tpu_custom_call.1} parent=1 // pred_check_branch
      %594 = sbr.rel (0) target = $region17
    $region16: #{tpu_custom_call.1} parent=1 // pred_region
      %595 = dma.done [#allocation4], 256
    $region17: #{tpu_custom_call.1} parent=1 // pred_fallthru
      _
    %596 = vsyncpa [#allocation4], 1

</llo_original>
